<compile_context>
chip_gen: v6e
topology: v6e:2x2x1
jax: 0.10.0
libtpu: 0.0.40
codegen_flags: <defaults>
</compile_context>

<pallas_src>
import functools

import jax
import jax.numpy as jnp
from jax.experimental import pallas as pl
from jax.experimental.pallas import tpu as pltpu


def _imagenetx_kernel(x_ref, w_ref, b_ref, o_ref, *, num_channels, hw_padded):
    # x_ref: (Bt, C*HWp) lane-dense (f32 or bf16)
    # w_ref: (C, Kp) f32   -- 1/std and 1/HW already folded in, mask applied
    # b_ref: (1, Kp) f32   -- normalize shift already folded in, mask applied
    # o_ref: (Bt, Kp) f32
    w_all = w_ref[...]                                        # (C, Kp), tiny
    acc = None
    for c in range(num_channels):                             # static unroll, C is 3-4
        # contiguous, lane-aligned slice of channel c: (Bt, HWp)
        xc = x_ref[:, pl.ds(c * hw_padded, hw_padded)]
        # fused upcast + lane reduction with f32 accumulation: (Bt, 1)
        sc = jnp.sum(xc, axis=-1, keepdims=True, dtype=jnp.float32)
        # broadcast-FMA on the VPU: (Bt, 1) * (1, Kp) -> (Bt, Kp)
        contrib = sc * w_all[c:c + 1, :]
        acc = contrib if acc is None else acc + contrib
    o_ref[...] = acc + b_ref[...]


def imagenetx_wrapper_forward(x, mean, std, w, b, mask_idx, num_classes,
                              *, batch_tile=32, vmem_limit_bytes=48 << 20):
    """x: [B, C, H, W] (f32 or bf16). Returns masked logits [B, len(mask_idx)] f32."""
    B, C, H, W = x.shape
    K = num_classes
    Km = int(mask_idx.shape[0])
    HW = H * W

    # ---- host-side algebraic folds (exact for the linear GAP+FC head, kept in f32) ----
    mean1 = mean.reshape(C).astype(jnp.float32)
    std1 = std.reshape(C).astype(jnp.float32)
    w32 = w.astype(jnp.float32)
    b32 = b.reshape(K).astype(jnp.float32)

    inv_std = 1.0 / std1
    w_eff = w32 * (inv_std / float(HW))[:, None]     # (C, K): normalize scale + GAP 1/HW
    b_eff = b32 - (mean1 * inv_std) @ w32            # (K,):  normalize shift

    # Fold ImageNetXMaskingLayer (column gather) into the head.
    w_m = jnp.take(w_eff, mask_idx, axis=1)          # (C, Km)
    b_m = jnp.take(b_eff, mask_idx, axis=0)          # (Km,)

    # Pad masked-class dim to a lane multiple -> unmasked lane-dense output stores.
    Kp = pl.cdiv(Km, 128) * 128
    w_m = jnp.pad(w_m, ((0, 0), (0, Kp - Km)))
    b_m = jnp.pad(b_m, (0, Kp - Km)).reshape(1, Kp)

    # ---- dense 2D view of x: (B, C*HWp); pad spatial dim to lane multiple if needed ----
    HWp = pl.cdiv(HW, 128) * 128
    x3 = x.reshape(B, C, HW)
    if HWp != HW:
        # zero padding does not change the channel sums; 1/HW uses the true HW
        x3 = jnp.pad(x3, ((0, 0), (0, 0), (0, HWp - HW)))
    x2 = x3.reshape(B, C * HWp)

    # ---- batch tile sizing ------------------------------------------------------------
    itemsize = jnp.dtype(x.dtype).itemsize
    per_row_bytes = C * HWp * itemsize
    Bt = max(8, (int(batch_tile) // 8) * 8)                       # sublane multiple
    fit_rows = max(8, (int(0.75 * vmem_limit_bytes) // (2 * per_row_bytes)) // 8 * 8)
    Bt = min(Bt, int(fit_rows))                                   # 2 buffers under budget
    Bt = min(Bt, max(8, pl.cdiv(B, 8) * 8))                       # don't over-pad tiny B
    if B > 8:
        Bt = min(Bt, max(8, pl.cdiv(pl.cdiv(B, 2), 8) * 8))       # keep >= 2 grid steps
    Bp = pl.cdiv(B, Bt) * Bt
    if Bp != B:
        x2 = jnp.pad(x2, ((0, Bp - B), (0, 0)))

    kernel = functools.partial(_imagenetx_kernel, num_channels=C, hw_padded=HWp)

    cost = pl.CostEstimate(
        flops=int(Bp) * C * (HWp + 2 * Kp),
        transcendentals=0,
        bytes_accessed=int(x2.size) * itemsize
        + (int(w_m.size) + int(b_m.size) + int(Bp) * int(Kp)) * 4,
    )

    out = pl.pallas_call(
        kernel,
        out_shape=jax.ShapeDtypeStruct((Bp, Kp), jnp.float32),
        grid=(Bp // Bt,),
        in_specs=[
            pl.BlockSpec((Bt, C * HWp), lambda i: (i, 0)),   # batch-tiled, double-buffered
            pl.BlockSpec((C, Kp), lambda i: (0, 0)),          # VMEM-resident folded weights
            pl.BlockSpec((1, Kp), lambda i: (0, 0)),          # VMEM-resident folded bias
        ],
        out_specs=pl.BlockSpec((Bt, Kp), lambda i: (i, 0)),
        compiler_params=pltpu.CompilerParams(
            dimension_semantics=("parallel",),
            vmem_limit_bytes=int(vmem_limit_bytes),
        ),
        cost_estimate=cost,
    )(x2, w_m, b_m)

    return out[:B, :Km]


if __name__ == "__main__":
    # Small shapes consistent with the forward: batch=2, channels=4, spatial=16,
    # num_classes=32, masked subset of 8 classes.
    B, C, H, W = 2, 4, 16, 16
    K, Km = 32, 8

    key = jax.random.PRNGKey(0)
    kx, kw, kb = jax.random.split(key, 3)

    x_f32 = jax.random.normal(kx, (B, C, H, W), dtype=jnp.float32)
    # Feed bf16 activations (halves HBM read traffic); kernel accumulates in f32.
    x = x_f32.astype(jnp.bfloat16)

    # Deterministic "normalize" parameters (per-channel mean / std).
    mean = jnp.array([0.485, 0.456, 0.406, 0.5][:C], dtype=jnp.float32)
    std = jnp.array([0.229, 0.224, 0.225, 0.25][:C], dtype=jnp.float32)

    # Deterministic synthetic classifier weights.
    w = jax.random.normal(kw, (C, K), dtype=jnp.float32) * 0.1
    b = jax.random.normal(kb, (K,), dtype=jnp.float32) * 0.01

    # Mask: list of class indices (as in ImageNet-R / ImageNet-A index lists).
    mask_idx = jnp.array([3, 0, 7, 12, 21, 30, 5, 18], dtype=jnp.int32)

    out = imagenetx_wrapper_forward(x, mean, std, w, b, mask_idx, num_classes=K)
    out = jax.block_until_ready(out)

    # Pure-JAX reference (unfolded) on the same bf16 activations, computed in f32.
    xr = x.astype(jnp.float32)
    xn_ref = (xr - mean.reshape(1, C, 1, 1)) / std.reshape(1, C, 1, 1)
    logits_ref = jnp.mean(xn_ref, axis=(2, 3)) @ w + b
    ref = logits_ref[:, mask_idx]

    assert out.shape == (B, Km) and out.dtype == jnp.float32
    assert jnp.allclose(out, ref, atol=5e-4, rtol=5e-4)

    print("KERNEL_OK")
</pallas_src>

<mosaic_0001>
module attributes {stable_mosaic.version = 11 : i64} {
  func.func @_imagenetx_kernel(%arg0: i32, %arg1: memref<8x1024xbf16, #tpu.memory_space<vmem>>, %arg2: memref<4x128xf32, #tpu.memory_space<vmem>>, %arg3: memref<1x128xf32, #tpu.memory_space<vmem>>, %arg4: memref<8x128xf32, #tpu.memory_space<vmem>>) attributes {dimension_semantics = [#tpu.dimension_semantics<parallel>], iteration_bounds = array<i64: 1>, scalar_prefetch = 0 : i64, scratch_operands = 0 : i64, tpu.core_type = #tpu.core_type<tc>, window_params = [{transform_indices = @transform_0, window_bounds = array<i64: 8, 1024>}, {pipeline_mode = #tpu.pipeline_mode<synchronous>, transform_indices = @transform_1, window_bounds = array<i64: 4, 128>}, {pipeline_mode = #tpu.pipeline_mode<synchronous>, transform_indices = @transform_2, window_bounds = array<i64: 1, 128>}, {transform_indices = @transform_3, window_bounds = array<i64: 8, 128>}]} {
    %c0 = arith.constant 0 : index
    %c0_0 = arith.constant 0 : index
    %0 = vector.load %arg2[%c0, %c0_0] : memref<4x128xf32, #tpu.memory_space<vmem>>, vector<4x128xf32>
    %c0_1 = arith.constant 0 : index
    %c0_2 = arith.constant 0 : index
    %1 = vector.load %arg1[%c0_1, %c0_2] : memref<8x1024xbf16, #tpu.memory_space<vmem>>, vector<8x256xbf16>
    %2 = arith.extf %1 : vector<8x256xbf16> to vector<8x256xf32>
    %cst = arith.constant dense<0.000000e+00> : vector<8xf32>
    %3 = vector.multi_reduction <add>, %2, %cst [1] : vector<8x256xf32> to vector<8xf32>
    %4 = vector.shape_cast %3 : vector<8xf32> to vector<8x1xf32>
    %5 = vector.extract_strided_slice %0 {offsets = [0, 0], sizes = [1, 128], strides = [1, 1]} : vector<4x128xf32> to vector<1x128xf32>
    %6 = vector.broadcast %4 : vector<8x1xf32> to vector<8x128xf32>
    %7 = vector.broadcast %5 : vector<1x128xf32> to vector<8x128xf32>
    %8 = arith.mulf %6, %7 : vector<8x128xf32>
    %c0_3 = arith.constant 0 : index
    %c256 = arith.constant 256 : index
    %9 = vector.load %arg1[%c0_3, %c256] : memref<8x1024xbf16, #tpu.memory_space<vmem>>, vector<8x256xbf16>
    %10 = arith.extf %9 : vector<8x256xbf16> to vector<8x256xf32>
    %cst_4 = arith.constant dense<0.000000e+00> : vector<8xf32>
    %11 = vector.multi_reduction <add>, %10, %cst_4 [1] : vector<8x256xf32> to vector<8xf32>
    %12 = vector.shape_cast %11 : vector<8xf32> to vector<8x1xf32>
    %13 = vector.extract_strided_slice %0 {offsets = [1, 0], sizes = [1, 128], strides = [1, 1]} : vector<4x128xf32> to vector<1x128xf32>
    %14 = vector.broadcast %12 : vector<8x1xf32> to vector<8x128xf32>
    %15 = vector.broadcast %13 : vector<1x128xf32> to vector<8x128xf32>
    %16 = arith.mulf %14, %15 : vector<8x128xf32>
    %17 = arith.addf %8, %16 : vector<8x128xf32>
    %c0_5 = arith.constant 0 : index
    %c512 = arith.constant 512 : index
    %18 = vector.load %arg1[%c0_5, %c512] : memref<8x1024xbf16, #tpu.memory_space<vmem>>, vector<8x256xbf16>
    %19 = arith.extf %18 : vector<8x256xbf16> to vector<8x256xf32>
    %cst_6 = arith.constant dense<0.000000e+00> : vector<8xf32>
    %20 = vector.multi_reduction <add>, %19, %cst_6 [1] : vector<8x256xf32> to vector<8xf32>
    %21 = vector.shape_cast %20 : vector<8xf32> to vector<8x1xf32>
    %22 = vector.extract_strided_slice %0 {offsets = [2, 0], sizes = [1, 128], strides = [1, 1]} : vector<4x128xf32> to vector<1x128xf32>
    %23 = vector.broadcast %21 : vector<8x1xf32> to vector<8x128xf32>
    %24 = vector.broadcast %22 : vector<1x128xf32> to vector<8x128xf32>
    %25 = arith.mulf %23, %24 : vector<8x128xf32>
    %26 = arith.addf %17, %25 : vector<8x128xf32>
    %c0_7 = arith.constant 0 : index
    %c768 = arith.constant 768 : index
    %27 = vector.load %arg1[%c0_7, %c768] : memref<8x1024xbf16, #tpu.memory_space<vmem>>, vector<8x256xbf16>
    %28 = arith.extf %27 : vector<8x256xbf16> to vector<8x256xf32>
    %cst_8 = arith.constant dense<0.000000e+00> : vector<8xf32>
    %29 = vector.multi_reduction <add>, %28, %cst_8 [1] : vector<8x256xf32> to vector<8xf32>
    %30 = vector.shape_cast %29 : vector<8xf32> to vector<8x1xf32>
    %31 = vector.extract_strided_slice %0 {offsets = [3, 0], sizes = [1, 128], strides = [1, 1]} : vector<4x128xf32> to vector<1x128xf32>
    %32 = vector.broadcast %30 : vector<8x1xf32> to vector<8x128xf32>
    %33 = vector.broadcast %31 : vector<1x128xf32> to vector<8x128xf32>
    %34 = arith.mulf %32, %33 : vector<8x128xf32>
    %35 = arith.addf %26, %34 : vector<8x128xf32>
    %c0_9 = arith.constant 0 : index
    %c0_10 = arith.constant 0 : index
    %36 = vector.load %arg3[%c0_9, %c0_10] : memref<1x128xf32, #tpu.memory_space<vmem>>, vector<1x128xf32>
    %37 = vector.broadcast %36 : vector<1x128xf32> to vector<8x128xf32>
    %38 = arith.addf %35, %37 : vector<8x128xf32>
    %c0_11 = arith.constant 0 : index
    %c0_12 = arith.constant 0 : index
    %39 = vector.load %arg4[%c0_11, %c0_12] : memref<8x128xf32, #tpu.memory_space<vmem>>, vector<8x128xf32>
    tpu.vector_store %arg4[%c0_11, %c0_12], %38 {strides = array<i32>} : memref<8x128xf32, #tpu.memory_space<vmem>>, vector<8x128xf32>,
    return
  }
  func.func @transform_0(%arg0: i32) -> (i32, i32) {
    %c0_i32 = arith.constant 0 : i32
    %c0_i32_0 = arith.constant 0 : i32
    return %arg0, %c0_i32 : i32, i32
  }
  func.func @transform_1(%arg0: i32) -> (i32, i32) {
    %c0_i32 = arith.constant 0 : i32
    %c0_i32_0 = arith.constant 0 : i32
    %c0_i32_1 = arith.constant 0 : i32
    return %c0_i32, %c0_i32_0 : i32, i32
  }
  func.func @transform_2(%arg0: i32) -> (i32, i32) {
    %c0_i32 = arith.constant 0 : i32
    %c0_i32_0 = arith.constant 0 : i32
    %c0_i32_1 = arith.constant 0 : i32
    return %c0_i32, %c0_i32_0 : i32, i32
  }
  func.func @transform_3(%arg0: i32) -> (i32, i32) {
    %c0_i32 = arith.constant 0 : i32
    %c0_i32_0 = arith.constant 0 : i32
    return %arg0, %c0_i32 : i32, i32
  }
}

</mosaic_0001>

<llo_original>
// kernel: tpu_custom_call.1
$region0: #{tpu_custom_call.1}
  #allocation0 [shape = 'u32[]', space=smem, size = 0x4, offset = 0x4, fixed_abs, tag = 'smem constant byte address 0x4 - core index']
  #allocation1 [shape = 'u32[144,128]{1,0:T(1,128)}', space=vmem, size = 0x12000, scoped, tag = 'internal scratch']
  %s0 = inlined_call_operand.hbm [shape: bf16[8,1024], index: 0, kind: input, shape index: {}]
  %s1 = inlined_call_operand.hbm [shape: f32[4,128], index: 1, kind: input, shape index: {}]
  %s2 = inlined_call_operand.vmem [shape: f32[1,128], index: 2, kind: input, shape index: {}]
  %s3 = inlined_call_operand.hbm [shape: f32[8,128], index: 3, kind: output, shape index: {}]
  %s4 = sld [smem:[#allocation0]]
  $region30: #{tpu_custom_call.1} parent=0
    _
  %s6 = ssub.s32 1, %s4
  %s7 = scalar_select 0, %s6, %s4
  $region1: #{tpu_custom_call.1} parent=0
    #allocation2 [shape = 'u8[16384]{0}', space=vmem, size = 0x4000, scoped, tag = 'input window, operand 0, single buffered']
    #allocation3 [shape = 's32[1]{0}', space=sflag, size = 0x4, scoped, tag = 'scoped memory for tpu_custom_call.1']
    #allocation4 [shape = 's32[1]{0}', space=sflag, size = 0x4, scoped, tag = 'scoped memory for tpu_custom_call.1']
    #allocation5 [shape = 'u8[2048]{0}', space=vmem, size = 0x800, scoped, tag = 'input window, operand 1, single buffered']
    #allocation6 [shape = 's32[1]{0}', space=sflag, size = 0x4, scoped, tag = 'scoped memory for tpu_custom_call.1']
    #allocation7 [shape = 'u8[4096]{0}', space=vmem, size = 0x1000, scoped, tag = 'output window, operand 0, single buffered']
    %8 = vsyncpa [#allocation3], 0
    %9 = vsyncpa [#allocation6], 0
    %10 = vsyncpa [#allocation4], 0
    // Predicated region
    $region2: #{tpu_custom_call.1} parent=1 // pred_check
      _
    $region3: #{tpu_custom_call.1} parent=1 // pred_check_branch
      %12 = sbr.rel (0) target = $region5
    $region4: #{tpu_custom_call.1} parent=1 // pred_region
      %s14 = ssub.s32 512, 512
      %15 = vsyncadd [#allocation3], %s14
      %s17 = sshll.u32 [#allocation2], 4
      %s18 = int_to_ptr.vmem [resolvable:$true] %s17
      %20 = dma.hbm_to_vmem [thread:$0]  %s0, 512, %s18, [#allocation3]
    $region5: #{tpu_custom_call.1} parent=1 // pred_fallthru
      _
    // Predicated region
    $region6: #{tpu_custom_call.1} parent=1 // pred_check
      _
    $region7: #{tpu_custom_call.1} parent=1 // pred_check_branch
      %22 = sbr.rel (0) target = $region9
    $region8: #{tpu_custom_call.1} parent=1 // pred_region
      %s24 = ssub.s32 64, 64
      %25 = vsyncadd [#allocation6], %s24
      %s27 = sshll.u32 [#allocation5], 4
      %s28 = int_to_ptr.vmem [resolvable:$true] %s27
      %30 = dma.hbm_to_vmem [thread:$0]  %s1, 64, %s28, [#allocation6]
    $region9: #{tpu_custom_call.1} parent=1 // pred_fallthru
      _
    // Predicated region
    $region10: #{tpu_custom_call.1} parent=1 // pred_check
      _
    $region11: #{tpu_custom_call.1} parent=1 // pred_check_branch
      %32 = sbr.rel (0) target = $region13
    $region12: #{tpu_custom_call.1} parent=1 // pred_region
      _
    $region13: #{tpu_custom_call.1} parent=1 // pred_fallthru
      _
    // Predicated region
    $region14: #{tpu_custom_call.1} parent=1 // pred_check
      _
    $region15: #{tpu_custom_call.1} parent=1 // pred_check_branch
      %34 = sbr.rel (0) target = $region17
    $region16: #{tpu_custom_call.1} parent=1 // pred_region
      %35 = dma.done [#allocation3], 512
    $region17: #{tpu_custom_call.1} parent=1 // pred_fallthru
      _
    // Predicated region
    $region18: #{tpu_custom_call.1} parent=1 // pred_check
      _
    $region19: #{tpu_custom_call.1} parent=1 // pred_check_branch
      %37 = sbr.rel (0) target = $region21
    $region20: #{tpu_custom_call.1} parent=1 // pred_region
      %38 = dma.done [#allocation6], 64
    $region21: #{tpu_custom_call.1} parent=1 // pred_fallthru
      _
    %v39 = vld [vmem:[#allocation5] sm:$0xf]
    %v40 = vld [vmem:[#allocation2] sm:$0xff]
    %v41 = vunpack.c.l.bf16 %v40
    %v42 = vunpack.c.h.bf16 %v40
    %v43 = vadd.f32 %v41, %v42
    %44 = vadd.xlane.f32.xlu0 %v43
    %v45 = vpop.xlane.xlu0 %44
    %v46 = vlaneseq
    %v47 = vshrl.u32 %v46, 7
    %v48 = vsub.s32 0, %v47
    %v49 = vrot.slane %v39, %v48
    %v50 = vmul.f32 %v45, %v49
    %v51 = vld [vmem:[#allocation2 + $0x8] sm:$0xff]
    %v52 = vunpack.c.l.bf16 %v51
    %v53 = vunpack.c.h.bf16 %v51
    %v54 = vadd.f32 %v52, %v53
    %55 = vadd.xlane.f32.xlu0 %v54
    %v56 = vpop.xlane.xlu0 %55
    %v57 = vlaneseq
    %v58 = vshrl.u32 %v57, 7
    %v59 = vsub.s32 1, %v58
    %v60 = vrot.slane %v39, %v59
    %v61 = vmul.f32 %v56, %v60
    %v62 = vadd.f32 %v50, %v61
    %v63 = vld [vmem:[#allocation2 + $0x10] sm:$0xff]
    %v64 = vunpack.c.l.bf16 %v63
    %v65 = vunpack.c.h.bf16 %v63
    %v66 = vadd.f32 %v64, %v65
    %67 = vadd.xlane.f32.xlu0 %v66
    %v68 = vpop.xlane.xlu0 %67
    %v69 = vlaneseq
    %v70 = vshrl.u32 %v69, 7
    %v71 = vsub.s32 2, %v70
    %v72 = vrot.slane %v39, %v71
    %v73 = vmul.f32 %v68, %v72
    %v74 = vadd.f32 %v62, %v73
    %v75 = vld [vmem:[#allocation2 + $0x18] sm:$0xff]
    %v76 = vunpack.c.l.bf16 %v75
    %v77 = vunpack.c.h.bf16 %v75
    %v78 = vadd.f32 %v76, %v77
    %79 = vadd.xlane.f32.xlu0 %v78
    %v80 = vpop.xlane.xlu0 %79
    %v81 = vlaneseq
    %v82 = vshrl.u32 %v81, 7
    %v83 = vsub.s32 3, %v82
    %v84 = vrot.slane %v39, %v83
    %v85 = vmul.f32 %v80, %v84
    %v86 = vadd.f32 %v74, %v85
    %v87 = vld [vmem:[%s2] sm:$0x1]
    %v89 = vlaneseq
    %v90 = vshrl.u32 %v89, 7
    %v91 = vsub.s32 0, %v90
    %v92 = vrot.slane %v87, %v91
    %v94 = vadd.f32 %v86, %v92
    %95 = vst [vmem:[#allocation7] sm:$0xff] %v94
    // Predicated region
    $region22: #{tpu_custom_call.1} parent=1 // pred_check
      _
    $region23: #{tpu_custom_call.1} parent=1 // pred_check_branch
      %97 = sbr.rel (0) target = $region25
    $region24: #{tpu_custom_call.1} parent=1 // pred_region
      %s99 = ssub.s32 128, 128
      %100 = vsyncadd [#allocation4], %s99
      %s102 = sshll.u32 [#allocation7], 4
      %s103 = int_to_ptr.vmem [resolvable:$true] %s102
      %105 = dma.vmem_to_hbm [thread:$0]  %s103, 128, %s3, [#allocation4]
    $region25: #{tpu_custom_call.1} parent=1 // pred_fallthru
      _
    // Predicated region
    $region26: #{tpu_custom_call.1} parent=1 // pred_check
      _
    $region27: #{tpu_custom_call.1} parent=1 // pred_check_branch
      %107 = sbr.rel (0) target = $region29
    $region28: #{tpu_custom_call.1} parent=1 // pred_region
      %108 = dma.done [#allocation4], 128
    $region29: #{tpu_custom_call.1} parent=1 // pred_fallthru
      _
    %109 = vsyncpa [#allocation3], 1
    %110 = vsyncpa [#allocation6], 1
    %111 = vsyncpa [#allocation4], 1

</llo_original>
